<compile_context>
chip_gen: v6e
topology: v6e:2x2x1
jax: 0.10.0
libtpu: 0.0.40
codegen_flags: <defaults>
</compile_context>

<pallas_src>
import functools

import jax
import jax.numpy as jnp
from jax.experimental import pallas as pl
from jax.experimental.pallas import tpu as pltpu

BN_EPS = 1e-5
C_HID = 64                      # hidden width of every block
C_BUF = 128                     # decoder conv input width: [current 0:64 | skip 64:128]
MATMUL_DTYPE = jnp.bfloat16     # set to jnp.float32 for exact-f32 parity (slower MXU path)


# ----------------------------------------------------------------------------
# Runtime probe: pin down the hardware rotate direction of pltpu.roll so the
# kernel is robust across jax versions.  Must be called OUTSIDE jit.
# ----------------------------------------------------------------------------
def _roll_matches_jnp(nhw):
    def k(x_ref, o_ref):
        o_ref[...] = pltpu.roll(x_ref[...], 1, axis=1)

    x = jax.lax.broadcasted_iota(jnp.float32, (8, nhw), 1)
    y = pl.pallas_call(k, out_shape=jax.ShapeDtypeStruct((8, nhw), jnp.float32))(x)
    # jnp.roll(x, 1, axis=1)[0, 1] == x[0, 0] == 0
    return bool(y[0, 1] == 0.0)


# ----------------------------------------------------------------------------
# Fused whole-network kernel
# ----------------------------------------------------------------------------
def _ccn_kernel(N, H, W, roll_like_jnp,
                x_ref, wenc_ref, wdec_ref, wout_ref, bout_ref, gam_ref, bet_ref,
                o_ref,
                mask_ref, s1_ref, s2_ref, s3_ref, s4_ref):
    NHW = N * H * W
    inv_cnt = 1.0 / float(NHW)

    # ---- 3x3 border masks, one (1, NHW) lane row-vector per tap, computed once ----
    col = jax.lax.broadcasted_iota(jnp.int32, (1, NHW), 1)
    hh = (col // W) % H
    ww = col % W
    for t in range(9):
        dh, dw = t // 3 - 1, t % 3 - 1
        ok = ((hh + dh >= 0) & (hh + dh < H) & (ww + dw >= 0) & (ww + dw < W))
        mask_ref[t] = ok.astype(jnp.float32)

    def conv(a, wget):
        """3x3 'same' conv: a (Cin, NHW) f32 -> (Cout, NHW) f32.

        Each tap is a lane rotation of the flat spatial axis (+ zero border mask),
        followed by one bf16 MXU matmul accumulated in f32.  Shift magnitude is at
        most W+1 < H*W, so valid taps never cross an image boundary; invalid taps
        (image border / batch wraparound) are zeroed by the mask.
        """
        acc = None
        for t in range(9):
            dh, dw = t // 3 - 1, t % 3 - 1
            s = dh * W + dw                       # flat spatial offset of this tap
            if s == 0:
                patch = a.astype(MATMUL_DTYPE)    # center tap: mask is all-ones
            else:
                shift = (-s) % NHW if roll_like_jnp else s % NHW
                shifted = pltpu.roll(a, shift, axis=1)
                patch = (shifted * mask_ref[t]).astype(MATMUL_DTYPE)
            part = jnp.dot(wget(t), patch, preferred_element_type=jnp.float32)
            acc = part if acc is None else acc + part
        return acc

    def bn_relu(y, i):
        # PyTorch training-mode BatchNorm2d (biased batch stats) + ReLU, f32,
        # single pass: var = E[y^2] - mean^2 (clamped at 0).
        g = gam_ref[i]                                         # (C_HID, 1)
        b = bet_ref[i]
        mean = jnp.sum(y, axis=1, keepdims=True) * inv_cnt
        msq = jnp.sum(y * y, axis=1, keepdims=True) * inv_cnt
        var = jnp.maximum(msq - mean * mean, 0.0)
        inv = jax.lax.rsqrt(var + BN_EPS)
        return jnp.maximum((y - mean) * inv * g + b, 0.0)

    def cat(cur, skip):
        # U-Net concat == aligned sublane concatenation (offset 64 is a tile multiple).
        return jnp.concatenate([cur, skip], axis=0)            # (128, NHW)

    x0 = x_ref[...]                                            # (C_HID, NHW), rows >= cin0 are 0

    # ---------------- encoder ----------------
    e1 = bn_relu(conv(x0, lambda t: wenc_ref[0, t]), 0)
    s1_ref[...] = e1
    e2 = bn_relu(conv(e1, lambda t: wenc_ref[1, t]), 1)
    s2_ref[...] = e2
    e3 = bn_relu(conv(e2, lambda t: wenc_ref[2, t]), 2)
    s3_ref[...] = e3
    e4 = bn_relu(conv(e3, lambda t: wenc_ref[3, t]), 3)
    s4_ref[...] = e4
    b5 = bn_relu(conv(e4, lambda t: wenc_ref[4, t]), 4)

    # ---------------- decoder (skips reloaded from VMEM scratch) ----------------
    b6 = bn_relu(conv(cat(b5, s4_ref[...]), lambda t: wdec_ref[0, t]), 5)
    b7 = bn_relu(conv(cat(b6, s3_ref[...]), lambda t: wdec_ref[1, t]), 6)
    b8 = bn_relu(conv(cat(b7, s2_ref[...]), lambda t: wdec_ref[2, t]), 7)
    b9 = bn_relu(conv(cat(b8, s1_ref[...]), lambda t: wdec_ref[3, t]), 8)
    b10 = bn_relu(conv(b9, lambda t: wenc_ref[5, t]), 9)

    # ---------------- output conv (bias, no BN / no ReLU) ----------------
    out = conv(b10, lambda t: wout_ref[t]) + bout_ref[...]
    o_ref[...] = out.astype(o_ref.dtype)


# ----------------------------------------------------------------------------
# Wrapper (takes / returns NCHW like the PyTorch module)
# ----------------------------------------------------------------------------
def ccn_forward(x_nchw, params, output_channels, roll_like_jnp=True):
    N, cin0, H, W = x_nchw.shape
    NHW = N * H * W
    assert NHW % 128 == 0, "N*H*W must be a multiple of 128 (lane tiling)"
    assert cin0 <= C_HID  # TODO(synk): support input_channels > 64 (widen the block-1 stack)
    cout_pad = params["w_out"].shape[1]

    # channels-on-sublanes layout: (C, N*H*W); flat spatial index = n*H*W + h*W + w
    x_cn = jnp.transpose(x_nchw, (1, 0, 2, 3)).reshape(cin0, NHW)
    x_cn = jnp.pad(x_cn, ((0, C_HID - cin0), (0, 0)))

    kernel = functools.partial(_ccn_kernel, N, H, W, roll_like_jnp)
    out = pl.pallas_call(
        kernel,
        out_shape=jax.ShapeDtypeStruct((cout_pad, NHW), jnp.float32),
        scratch_shapes=[
            pltpu.VMEM((9, 1, NHW), jnp.float32),       # 3x3 border masks
            pltpu.VMEM((C_HID, NHW), jnp.float32),      # encoder skip e1
            pltpu.VMEM((C_HID, NHW), jnp.float32),      # encoder skip e2
            pltpu.VMEM((C_HID, NHW), jnp.float32),      # encoder skip e3
            pltpu.VMEM((C_HID, NHW), jnp.float32),      # encoder skip e4
        ],
        compiler_params=pltpu.CompilerParams(
            vmem_limit_bytes=32 * 1024 * 1024),
    )(x_cn, params["w_enc"], params["w_dec"], params["w_out"], params["b_out"],
      params["gamma"], params["beta"])

    out = out.reshape(cout_pad, N, H, W).transpose(1, 0, 2, 3)   # NCHW
    return out[:, :output_channels]


# ----------------------------------------------------------------------------
# Parameter init (PyTorch-like scales) + one-time per-tap weight packing
# ----------------------------------------------------------------------------
def _init_conv_oihw(key, cin, cout):
    kw_, kb_ = jax.random.split(key)
    bound = 1.0 / float(cin * 9) ** 0.5
    w = jax.random.uniform(kw_, (cout, cin, 3, 3), jnp.float32, -bound, bound)
    b = jax.random.uniform(kb_, (cout,), jnp.float32, -bound, bound)
    return w, b


def _pack_per_tap(w_oihw, cin_pad, cout_pad=None):
    """OIHW (Cout, Cin, 3, 3) -> (9, Cout_pad, Cin_pad) in MATMUL_DTYPE (zero-padded)."""
    cout, cin = w_oihw.shape[0], w_oihw.shape[1]
    w = jnp.transpose(w_oihw, (2, 3, 0, 1)).reshape(9, cout, cin)
    cp = cout if cout_pad is None else cout_pad
    w = jnp.pad(w, ((0, 0), (0, cp - cout), (0, cin_pad - cin)))
    return w.astype(MATMUL_DTYPE)


def init_params(key, input_channels, output_channels):
    enc_cin = [input_channels, 64, 64, 64, 64]     # blocks 1..5 (real in-channels)
    dec_cin = [128, 128, 128, 128]                 # blocks 6..9
    keys = jax.random.split(key, 12)

    w64 = []                                       # 64-wide-input convs: blocks 1..5 and 10
    for k, cin in zip(keys[0:5], enc_cin):
        w, _b = _init_conv_oihw(k, cin, C_HID)
        # conv bias before BatchNorm is dropped: BN's batch-mean subtraction cancels it.
        w64.append(_pack_per_tap(w, cin_pad=C_HID))
    w128 = []
    for k, cin in zip(keys[5:9], dec_cin):
        w, _b = _init_conv_oihw(k, cin, C_HID)
        w128.append(_pack_per_tap(w, cin_pad=C_BUF))
    w10, _b10 = _init_conv_oihw(keys[9], C_HID, C_HID)
    w64.append(_pack_per_tap(w10, cin_pad=C_HID))

    w_out, b_out = _init_conv_oihw(keys[10], C_HID, output_channels)
    cout_pad = max(8, -(-output_channels // 8) * 8)

    return {
        "w_enc": jnp.stack(w64),                                   # (6, 9, 64, 64)  blocks 1-5, 10
        "w_dec": jnp.stack(w128),                                  # (4, 9, 64, 128) blocks 6-9
        "w_out": _pack_per_tap(w_out, cin_pad=C_HID, cout_pad=cout_pad),   # (9, cout_pad, 64)
        "b_out": jnp.pad(b_out, (0, cout_pad - output_channels)).reshape(cout_pad, 1),
        "gamma": jnp.ones((10, C_HID, 1), jnp.float32),            # BN weight (default 1)
        "beta": jnp.zeros((10, C_HID, 1), jnp.float32),            # BN bias   (default 0)
    }


# ----------------------------------------------------------------------------
# Pure-JAX (XLA) f32 reference using the same packed weights — correctness anchor
# ----------------------------------------------------------------------------
def reference_forward(x_nchw, params, output_channels):
    N, cin0, H, W = x_nchw.shape
    x = jnp.transpose(x_nchw, (0, 2, 3, 1))
    x = jnp.pad(x, ((0, 0), (0, 0), (0, 0), (0, C_HID - cin0)))
    wenc = params["w_enc"].astype(jnp.float32)
    wdec = params["w_dec"].astype(jnp.float32)
    wout = params["w_out"].astype(jnp.float32)

    def conv(a, w9):
        ap = jnp.pad(a, ((0, 0), (1, 1), (1, 1), (0, 0)))
        out = 0.0
        for t in range(9):
            kh, kw = divmod(t, 3)
            out = out + jnp.einsum("nhwc,oc->nhwo", ap[:, kh:kh + H, kw:kw + W, :],
                                   w9[t], precision=jax.lax.Precision.HIGHEST)
        return out

    def bn_relu(y, i):
        mean = jnp.mean(y, axis=(0, 1, 2), keepdims=True)
        var = jnp.mean((y - mean) ** 2, axis=(0, 1, 2), keepdims=True)
        g = params["gamma"][i, :, 0].reshape(1, 1, 1, -1)
        b = params["beta"][i, :, 0].reshape(1, 1, 1, -1)
        return jnp.maximum((y - mean) * jax.lax.rsqrt(var + BN_EPS) * g + b, 0.0)

    ccat = lambda a, b: jnp.concatenate([a, b], axis=-1)

    e1 = bn_relu(conv(x, wenc[0]), 0)
    e2 = bn_relu(conv(e1, wenc[1]), 1)
    e3 = bn_relu(conv(e2, wenc[2]), 2)
    e4 = bn_relu(conv(e3, wenc[3]), 3)
    b5 = bn_relu(conv(e4, wenc[4]), 4)
    b6 = bn_relu(conv(ccat(b5, e4), wdec[0]), 5)
    b7 = bn_relu(conv(ccat(b6, e3), wdec[1]), 6)
    b8 = bn_relu(conv(ccat(b7, e2), wdec[2]), 7)
    b9 = bn_relu(conv(ccat(b8, e1), wdec[3]), 8)
    b10 = bn_relu(conv(b9, wenc[5]), 9)
    out = conv(b10, wout) + params["b_out"][:, 0].reshape(1, 1, 1, -1)
    out = out[..., :output_channels]
    return jnp.transpose(out, (0, 3, 1, 2))


# ----------------------------------------------------------------------------
if __name__ == "__main__":
    input_channels, output_channels = 4, 3
    N, H, W = 2, 16, 16

    key = jax.random.PRNGKey(0)
    k_x, k_p = jax.random.split(key)
    x_nchw = jax.random.normal(k_x, (N, input_channels, H, W), jnp.float32)
    params = init_params(k_p, input_channels, output_channels)

    roll_like_jnp = _roll_matches_jnp(N * H * W)   # eager probe, outside jit

    @jax.jit
    def run(x, p):
        return ccn_forward(x, p, output_channels, roll_like_jnp)

    out = run(x_nchw, params)
    jax.block_until_ready(out)
    assert out.shape == (N, output_channels, H, W)
    assert bool(jnp.all(jnp.isfinite(out)))

    # Loose correctness check vs a pure-JAX f32 reference built from the same packed
    # weights (tolerance covers the deliberate bf16 MXU operands).
    ref = jax.jit(lambda x, p: reference_forward(x, p, output_channels))(x_nchw, params)
    jax.block_until_ready(ref)
    err = float(jnp.max(jnp.abs(out - ref)))
    scale = 1.0 + float(jnp.max(jnp.abs(ref)))
    assert err <= 0.1 * scale, f"kernel/reference mismatch: max_err={err}, scale={scale}"

    print("KERNEL_OK")
</pallas_src>

<mosaic_0001>
module attributes {stable_mosaic.version = 11 : i64} {
  func.func @k(%arg0: memref<8x512xf32, #tpu.memory_space<vmem>>, %arg1: memref<8x512xf32, #tpu.memory_space<vmem>>) attributes {dimension_semantics = [], scalar_prefetch = 0 : i64, scratch_operands = 0 : i64, tpu.core_type = #tpu.core_type<tc>} {
    %c0 = arith.constant 0 : index
    %c0_0 = arith.constant 0 : index
    %0 = vector.load %arg0[%c0, %c0_0] : memref<8x512xf32, #tpu.memory_space<vmem>>, vector<8x512xf32>
    %c1_i32 = arith.constant 1 : i32
    %1 = tpu.dynamic_rotate %0 by %c1_i32 dim 1 : vector<8x512xf32>, i32 -> vector<8x512xf32>
    %c0_1 = arith.constant 0 : index
    %c0_2 = arith.constant 0 : index
    %2 = vector.load %arg1[%c0_1, %c0_2] : memref<8x512xf32, #tpu.memory_space<vmem>>, vector<8x512xf32>
    tpu.vector_store %arg1[%c0_1, %c0_2], %1 {strides = array<i32>} : memref<8x512xf32, #tpu.memory_space<vmem>>, vector<8x512xf32>,
    return
  }
}

</mosaic_0001>

<llo_original>
// kernel: tpu_custom_call.1
$region0: #{tpu_custom_call.1}
  #allocation0 [shape = 'u32[]', space=smem, size = 0x4, offset = 0x4, fixed_abs, tag = 'smem constant byte address 0x4 - core index']
  #allocation1 [shape = 'u32[144,128]{1,0:T(1,128)}', space=vmem, size = 0x12000, scoped, tag = 'internal scratch']
  %s0 = inlined_call_operand.hbm [shape: f32[8,512], index: 0, kind: input, shape index: {}]
  %s1 = inlined_call_operand.hbm [shape: f32[8,512], index: 1, kind: output, shape index: {}]
  %s2 = sld [smem:[#allocation0]]
  $region18: #{tpu_custom_call.1} parent=0
    _
  %s4 = ssub.s32 1, %s2
  %s5 = scalar_select 0, %s4, %s2
  $region1: #{tpu_custom_call.1} parent=0
    #allocation2 [shape = 'u8[16384]{0}', space=vmem, size = 0x4000, scoped, tag = 'input window, operand 0, single buffered']
    #allocation3 [shape = 's32[1]{0}', space=sflag, size = 0x4, scoped, tag = 'scoped memory for tpu_custom_call.1']
    #allocation4 [shape = 's32[1]{0}', space=sflag, size = 0x4, scoped, tag = 'scoped memory for tpu_custom_call.1']
    #allocation5 [shape = 'u8[16384]{0}', space=vmem, size = 0x4000, scoped, tag = 'output window, operand 0, single buffered']
    %6 = vsyncpa [#allocation3], 0
    %7 = vsyncpa [#allocation4], 0
    // Predicated region
    $region2: #{tpu_custom_call.1} parent=1 // pred_check
      _
    $region3: #{tpu_custom_call.1} parent=1 // pred_check_branch
      %9 = sbr.rel (0) target = $region5
    $region4: #{tpu_custom_call.1} parent=1 // pred_region
      %s11 = ssub.s32 512, 512
      %12 = vsyncadd [#allocation3], %s11
      %s14 = sshll.u32 [#allocation2], 4
      %s15 = int_to_ptr.vmem [resolvable:$true] %s14
      %17 = dma.hbm_to_vmem [thread:$0]  %s0, 512, %s15, [#allocation3]
    $region5: #{tpu_custom_call.1} parent=1 // pred_fallthru
      _
    // Predicated region
    $region6: #{tpu_custom_call.1} parent=1 // pred_check
      _
    $region7: #{tpu_custom_call.1} parent=1 // pred_check_branch
      %19 = sbr.rel (0) target = $region9
    $region8: #{tpu_custom_call.1} parent=1 // pred_region
      %20 = dma.done [#allocation3], 512
    $region9: #{tpu_custom_call.1} parent=1 // pred_fallthru
      _
    %v21 = vld [vmem:[#allocation2] sm:$0xff]
    %v22 = vld [vmem:[#allocation2 + $0x8] sm:$0xff]
    %v23 = vld [vmem:[#allocation2 + $0x10] sm:$0xff]
    %v24 = vld [vmem:[#allocation2 + $0x18] sm:$0xff]
    %25 = vrot.lane.b32.xlu0 %v21, 1
    %v26 = vpop.permute.xlu0 %25
    %27 = vrot.lane.b32.xlu0 %v22, 1
    %v28 = vpop.permute.xlu0 %27
    %29 = vrot.lane.b32.xlu0 %v23, 1
    %v30 = vpop.permute.xlu0 %29
    %31 = vrot.lane.b32.xlu0 %v24, 1
    %v32 = vpop.permute.xlu0 %31
    %v33 = vlaneseq
    %v34 = vand.u32 %v33, 127
    %vm35 = vcmp.lt.s32.totalorder %v34, 1
    %v36 = vsel %vm35, %v30, %v32
    %v37 = vsel %vm35, %v28, %v30
    %v38 = vsel %vm35, %v26, %v28
    %v39 = vsel %vm35, %v32, %v26
    %40 = vst [vmem:[#allocation5] sm:$0xff] %v39
    %41 = vst [vmem:[#allocation5 + $0x8] sm:$0xff] %v38
    %42 = vst [vmem:[#allocation5 + $0x10] sm:$0xff] %v37
    %43 = vst [vmem:[#allocation5 + $0x18] sm:$0xff] %v36
    // Predicated region
    $region10: #{tpu_custom_call.1} parent=1 // pred_check
      _
    $region11: #{tpu_custom_call.1} parent=1 // pred_check_branch
      %45 = sbr.rel (0) target = $region13
    $region12: #{tpu_custom_call.1} parent=1 // pred_region
      %s47 = ssub.s32 512, 512
      %48 = vsyncadd [#allocation4], %s47
      %s50 = sshll.u32 [#allocation5], 4
      %s51 = int_to_ptr.vmem [resolvable:$true] %s50
      %53 = dma.vmem_to_hbm [thread:$0]  %s51, 512, %s1, [#allocation4]
    $region13: #{tpu_custom_call.1} parent=1 // pred_fallthru
      _
    // Predicated region
    $region14: #{tpu_custom_call.1} parent=1 // pred_check
      _
    $region15: #{tpu_custom_call.1} parent=1 // pred_check_branch
      %55 = sbr.rel (0) target = $region17
    $region16: #{tpu_custom_call.1} parent=1 // pred_region
      %56 = dma.done [#allocation4], 512
    $region17: #{tpu_custom_call.1} parent=1 // pred_fallthru
      _
    %57 = vsyncpa [#allocation3], 1
    %58 = vsyncpa [#allocation4], 1

</llo_original>
